<compile_context>
chip_gen: v5e
topology: v5e:2x2
jax: 0.10.0
libtpu: 0.0.40
codegen_flags: <defaults>
</compile_context>

<pallas_src>
import functools

import jax
import jax.numpy as jnp
from jax.experimental import pallas as pl
from jax.experimental.pallas import tpu as pltpu

# Small, module-consistent shapes.
B = 2          # batch
T = 8          # tokens
D_MODEL = 32   # latent
D_FF = 64      # feed-forward hidden
N_HEAD = 4
EPS = 1e-5


def _layer_norm(x, gamma, beta):
    mu = jnp.mean(x, axis=-1, keepdims=True)
    var = jnp.mean((x - mu) ** 2, axis=-1, keepdims=True)
    return (x - mu) * jax.lax.rsqrt(var + EPS) * gamma + beta


def encoder_layer_kernel(x_ref,
                         wqkv_ref, bqkv_ref,
                         hsum_ref, hexp_ref,
                         wo_ref, bo_ref,
                         g1_ref, be1_ref,
                         w1_ref, b1_ref, w2_ref, b2_ref,
                         g2_ref, be2_ref,
                         out_ref,
                         *, batch, tokens, n_head):
    rows, d = x_ref.shape          # (B*T, D)
    x = x_ref[...]                 # f32 slab, stays f32 throughout

    # ---- Fused QKV projection: one MXU push, N = 3*D --------------------
    # 1/sqrt(d_head) is pre-folded into the Q columns of wqkv/bqkv.
    qkv = jnp.dot(x, wqkv_ref[...],
                  preferred_element_type=jnp.float32) + bqkv_ref[...]   # (B*T, 3D)
    q_all = qkv[:, :d]             # 3 lane slices total (width D), not per head
    k_all = qkv[:, d:2 * d]
    v_all = qkv[:, 2 * d:]

    hsum = hsum_ref[...]           # (D, H)  one-hot: lane d -> its head
    hexp = hexp_ref[...]           # (H, D)  transpose (head -> its lanes)

    # ---- Multi-head self-attention, all heads at once per batch ---------
    # Scores and P@V are broadcast-multiply + reduce on the VPU; the segmented
    # per-head lane reduce / broadcast is a single tiny one-hot matmul each.
    ctx_parts = []
    for b in range(batch):                         # static loop, B=2
        r0 = b * tokens
        qb = q_all[r0:r0 + tokens]                 # (T, D) static row slices
        kb = k_all[r0:r0 + tokens]
        vb = v_all[r0:r0 + tokens]

        prod = qb[:, None, :] * kb[None, :, :]     # (Tq, Tk, D) on the VPU
        s = jnp.dot(prod.reshape(tokens * tokens, d), hsum,
                    preferred_element_type=jnp.float32)          # (Tq*Tk, H)
        s = s.reshape(tokens, tokens, n_head)      # (Tq, Tk, H)

        # softmax over the key axis (axis=1)
        s = s - jnp.max(s, axis=1, keepdims=True)
        p = jnp.exp(s)
        p = p * pl.reciprocal(jnp.sum(p, axis=1, keepdims=True), approx=True)

        # broadcast each head's prob across its d_head lanes, then P @ V on VPU
        pe = jnp.dot(p.reshape(tokens * tokens, n_head), hexp,
                     preferred_element_type=jnp.float32)         # (Tq*Tk, D)
        pe = pe.reshape(tokens, tokens, d)
        ctx_parts.append(jnp.sum(pe * vb[None, :, :], axis=1))   # (T, D)
    ctx = jnp.concatenate(ctx_parts, axis=0)       # (B*T, D)

    attn = jnp.dot(ctx, wo_ref[...],
                   preferred_element_type=jnp.float32) + bo_ref[...]
    # dropout_attn: identity (eval mode)

    # ---- Add & Norm 1 ----------------------------------------------------
    ehat = _layer_norm(attn + x, g1_ref[...], be1_ref[...])

    # ---- Position-wise feed forward (full (B*T, D) slab) -----------------
    f = jnp.dot(ehat, w1_ref[...],
                preferred_element_type=jnp.float32) + b1_ref[...]
    f = jnp.maximum(f, 0.0)                        # ReLU
    # dropout inside FFN: identity (eval mode)
    f = jnp.dot(f, w2_ref[...],
                preferred_element_type=jnp.float32) + b2_ref[...]
    # dropout_fcn: identity (eval mode)

    # ---- Add & Norm 2 ----------------------------------------------------
    out_ref[...] = _layer_norm(f + ehat, g2_ref[...], be2_ref[...]).astype(out_ref.dtype)


_PARAM_ORDER = ['wqkv', 'bqkv', 'hsum', 'hexp', 'wo', 'bo', 'g1', 'be1',
                'w1', 'b1', 'w2', 'b2', 'g2', 'be2']


def prepare_params(params, n_head=N_HEAD):
    """One-time packing: fuse QKV, fold attention scale into Q, build the
    one-hot head reduce/expand matrices.  Call once; not on the per-call path."""
    d = params['wq'].shape[0]
    d_head = d // n_head
    scale = 1.0 / jnp.sqrt(jnp.float32(d_head))
    wqkv = jnp.concatenate([params['wq'] * scale, params['wk'], params['wv']],
                           axis=1)
    bqkv = jnp.concatenate([params['bq'] * scale, params['bk'], params['bv']],
                           axis=1)
    head_of_lane = jnp.arange(d) // d_head
    hsum = (head_of_lane[:, None] == jnp.arange(n_head)[None, :]).astype(jnp.float32)
    return dict(
        wqkv=wqkv.astype(jnp.float32),
        bqkv=bqkv.astype(jnp.float32),
        hsum=hsum,                       # (D, H)
        hexp=hsum.T,                     # (H, D)
        wo=params['wo'].astype(jnp.float32),
        bo=params['bo'].astype(jnp.float32),
        g1=params['g1'].astype(jnp.float32),
        be1=params['be1'].astype(jnp.float32),
        w1=params['w1'].astype(jnp.float32),
        b1=params['b1'].astype(jnp.float32),
        w2=params['w2'].astype(jnp.float32),
        b2=params['b2'].astype(jnp.float32),
        g2=params['g2'].astype(jnp.float32),
        be2=params['be2'].astype(jnp.float32),
    )


@functools.partial(jax.jit, static_argnames=("n_head",))
def encoder_layer(x, packed, n_head=N_HEAD):
    b, t, d = x.shape
    x2d = x.reshape(b * t, d)            # 2-D end to end; reshape in the wrapper

    kernel = functools.partial(encoder_layer_kernel,
                               batch=b, tokens=t, n_head=n_head)
    vmem_spec = pl.BlockSpec(memory_space=pltpu.MemorySpace.VMEM)
    args = [x2d] + [packed[name] for name in _PARAM_ORDER]

    # Grid-less call: the whole problem (~60 KiB) lives in VMEM, no pipeline
    # prologue/epilogue and no double buffering of the tiny inputs.
    out2d = pl.pallas_call(
        kernel,
        out_shape=jax.ShapeDtypeStruct((b * t, d), x.dtype),
        in_specs=[vmem_spec] * len(args),
        out_specs=vmem_spec,
    )(*args)
    return out2d.reshape(b, t, d)


def init_params(key, d_model=D_MODEL, d_ff=D_FF):
    ks = jax.random.split(key, 12)

    def lin(k, fan_in, fan_out):
        bound = 1.0 / jnp.sqrt(fan_in)
        kw, kb = jax.random.split(k)
        w = jax.random.uniform(kw, (fan_in, fan_out), jnp.float32, -bound, bound)
        b = jax.random.uniform(kb, (1, fan_out), jnp.float32, -bound, bound)
        return w, b

    wq, bq = lin(ks[0], d_model, d_model)
    wk, bk = lin(ks[1], d_model, d_model)
    wv, bv = lin(ks[2], d_model, d_model)
    wo, bo = lin(ks[3], d_model, d_model)
    w1, b1 = lin(ks[4], d_model, d_ff)
    w2, b2 = lin(ks[5], d_ff, d_model)
    return dict(
        wq=wq, bq=bq, wk=wk, bk=bk, wv=wv, bv=bv, wo=wo, bo=bo,
        g1=jnp.ones((1, d_model), jnp.float32),
        be1=jnp.zeros((1, d_model), jnp.float32),
        w1=w1, b1=b1, w2=w2, b2=b2,
        g2=jnp.ones((1, d_model), jnp.float32),
        be2=jnp.zeros((1, d_model), jnp.float32),
    )


if __name__ == "__main__":
    key = jax.random.PRNGKey(0)
    kx, kp = jax.random.split(key)
    x = jax.random.normal(kx, (B, T, D_MODEL), jnp.float32)
    params = init_params(kp)

    packed = prepare_params(params, n_head=N_HEAD)   # packed once, cached
    packed = jax.tree_util.tree_map(jax.block_until_ready, packed)

    out = encoder_layer(x, packed, n_head=N_HEAD)
    out = jax.block_until_ready(out)
    assert out.shape == (B, T, D_MODEL) and out.dtype == jnp.float32
    assert bool(jnp.all(jnp.isfinite(out)))
    print("KERNEL_OK")
</pallas_src>

<mosaic_0001>
module attributes {stable_mosaic.version = 11 : i64} {
  func.func @encoder_layer_kernel(%arg0: memref<16x32xf32, #tpu.memory_space<vmem>>, %arg1: memref<32x96xf32, #tpu.memory_space<vmem>>, %arg2: memref<1x96xf32, #tpu.memory_space<vmem>>, %arg3: memref<32x4xf32, #tpu.memory_space<vmem>>, %arg4: memref<4x32xf32, #tpu.memory_space<vmem>>, %arg5: memref<32x32xf32, #tpu.memory_space<vmem>>, %arg6: memref<1x32xf32, #tpu.memory_space<vmem>>, %arg7: memref<1x32xf32, #tpu.memory_space<vmem>>, %arg8: memref<1x32xf32, #tpu.memory_space<vmem>>, %arg9: memref<32x64xf32, #tpu.memory_space<vmem>>, %arg10: memref<1x64xf32, #tpu.memory_space<vmem>>, %arg11: memref<64x32xf32, #tpu.memory_space<vmem>>, %arg12: memref<1x32xf32, #tpu.memory_space<vmem>>, %arg13: memref<1x32xf32, #tpu.memory_space<vmem>>, %arg14: memref<1x32xf32, #tpu.memory_space<vmem>>, %arg15: memref<16x32xf32, #tpu.memory_space<vmem>>) attributes {dimension_semantics = [], scalar_prefetch = 0 : i64, scratch_operands = 0 : i64, tpu.core_type = #tpu.core_type<tc>} {
    %c0 = arith.constant 0 : index
    %c0_0 = arith.constant 0 : index
    %0 = vector.load %arg0[%c0, %c0_0] : memref<16x32xf32, #tpu.memory_space<vmem>>, vector<16x32xf32>
    %c0_1 = arith.constant 0 : index
    %c0_2 = arith.constant 0 : index
    %1 = vector.load %arg1[%c0_1, %c0_2] : memref<32x96xf32, #tpu.memory_space<vmem>>, vector<32x96xf32>
    %cst = arith.constant dense<0.000000e+00> : vector<16x96xf32>
    %2 = tpu.matmul %0, %1, %cst {dimension_numbers = #tpu.dot_dimension_numbers<[1], [0], [0], [1], [0, 0, 1, 1], [], []>} : vector<16x32xf32>, vector<32x96xf32>, vector<16x96xf32> -> vector<16x96xf32>
    %c0_3 = arith.constant 0 : index
    %c0_4 = arith.constant 0 : index
    %3 = vector.load %arg2[%c0_3, %c0_4] : memref<1x96xf32, #tpu.memory_space<vmem>>, vector<1x96xf32>
    %4 = vector.broadcast %3 : vector<1x96xf32> to vector<16x96xf32>
    %5 = arith.addf %2, %4 : vector<16x96xf32>
    %6 = vector.extract_strided_slice %5 {offsets = [0, 0], sizes = [16, 32], strides = [1, 1]} : vector<16x96xf32> to vector<16x32xf32>
    %7 = vector.extract_strided_slice %5 {offsets = [0, 32], sizes = [16, 32], strides = [1, 1]} : vector<16x96xf32> to vector<16x32xf32>
    %8 = vector.extract_strided_slice %5 {offsets = [0, 64], sizes = [16, 32], strides = [1, 1]} : vector<16x96xf32> to vector<16x32xf32>
    %c0_5 = arith.constant 0 : index
    %c0_6 = arith.constant 0 : index
    %9 = vector.load %arg3[%c0_5, %c0_6] : memref<32x4xf32, #tpu.memory_space<vmem>>, vector<32x4xf32>
    %c0_7 = arith.constant 0 : index
    %c0_8 = arith.constant 0 : index
    %10 = vector.load %arg4[%c0_7, %c0_8] : memref<4x32xf32, #tpu.memory_space<vmem>>, vector<4x32xf32>
    %11 = vector.extract_strided_slice %6 {offsets = [0, 0], sizes = [8, 32], strides = [1, 1]} : vector<16x32xf32> to vector<8x32xf32>
    %12 = vector.extract_strided_slice %7 {offsets = [0, 0], sizes = [8, 32], strides = [1, 1]} : vector<16x32xf32> to vector<8x32xf32>
    %13 = vector.extract_strided_slice %8 {offsets = [0, 0], sizes = [8, 32], strides = [1, 1]} : vector<16x32xf32> to vector<8x32xf32>
    %14 = vector.shape_cast %11 : vector<8x32xf32> to vector<8x1x32xf32>
    %15 = vector.shape_cast %12 : vector<8x32xf32> to vector<1x8x32xf32>
    %16 = vector.broadcast %14 : vector<8x1x32xf32> to vector<8x8x32xf32>
    %17 = vector.broadcast %15 : vector<1x8x32xf32> to vector<8x8x32xf32>
    %18 = arith.mulf %16, %17 : vector<8x8x32xf32>
    %19 = vector.shape_cast %18 : vector<8x8x32xf32> to vector<64x32xf32>
    %cst_9 = arith.constant dense<0.000000e+00> : vector<64x4xf32>
    %20 = tpu.matmul %19, %9, %cst_9 {dimension_numbers = #tpu.dot_dimension_numbers<[1], [0], [0], [1], [0, 0, 1, 1], [], []>} : vector<64x32xf32>, vector<32x4xf32>, vector<64x4xf32> -> vector<64x4xf32>
    %21 = vector.shape_cast %20 : vector<64x4xf32> to vector<8x8x4xf32>
    %cst_10 = arith.constant dense<0xFF800000> : vector<8x4xf32>
    %22 = vector.multi_reduction <maximumf>, %21, %cst_10 [1] : vector<8x8x4xf32> to vector<8x4xf32>
    %23 = vector.shape_cast %22 : vector<8x4xf32> to vector<8x1x4xf32>
    %24 = vector.broadcast %23 : vector<8x1x4xf32> to vector<8x8x4xf32>
    %25 = arith.subf %21, %24 : vector<8x8x4xf32>
    %26 = math.exp %25 : vector<8x8x4xf32>
    %cst_11 = arith.constant dense<0.000000e+00> : vector<8x4xf32>
    %27 = vector.multi_reduction <add>, %26, %cst_11 [1] : vector<8x8x4xf32> to vector<8x4xf32>
    %28 = vector.shape_cast %27 : vector<8x4xf32> to vector<8x1x4xf32>
    %29 = tpu.reciprocal %28 {approx = true} : vector<8x1x4xf32> -> vector<8x1x4xf32>
    %30 = vector.broadcast %29 : vector<8x1x4xf32> to vector<8x8x4xf32>
    %31 = arith.mulf %26, %30 : vector<8x8x4xf32>
    %32 = vector.shape_cast %31 : vector<8x8x4xf32> to vector<64x4xf32>
    %cst_12 = arith.constant dense<0.000000e+00> : vector<64x32xf32>
    %33 = tpu.matmul %32, %10, %cst_12 {dimension_numbers = #tpu.dot_dimension_numbers<[1], [0], [0], [1], [0, 0, 1, 1], [], []>} : vector<64x4xf32>, vector<4x32xf32>, vector<64x32xf32> -> vector<64x32xf32>
    %34 = vector.shape_cast %33 : vector<64x32xf32> to vector<8x8x32xf32>
    %35 = vector.shape_cast %13 : vector<8x32xf32> to vector<1x8x32xf32>
    %36 = vector.broadcast %35 : vector<1x8x32xf32> to vector<8x8x32xf32>
    %37 = arith.mulf %34, %36 : vector<8x8x32xf32>
    %cst_13 = arith.constant dense<0.000000e+00> : vector<8x32xf32>
    %38 = vector.multi_reduction <add>, %37, %cst_13 [1] : vector<8x8x32xf32> to vector<8x32xf32>
    %39 = vector.extract_strided_slice %6 {offsets = [8, 0], sizes = [8, 32], strides = [1, 1]} : vector<16x32xf32> to vector<8x32xf32>
    %40 = vector.extract_strided_slice %7 {offsets = [8, 0], sizes = [8, 32], strides = [1, 1]} : vector<16x32xf32> to vector<8x32xf32>
    %41 = vector.extract_strided_slice %8 {offsets = [8, 0], sizes = [8, 32], strides = [1, 1]} : vector<16x32xf32> to vector<8x32xf32>
    %42 = vector.shape_cast %39 : vector<8x32xf32> to vector<8x1x32xf32>
    %43 = vector.shape_cast %40 : vector<8x32xf32> to vector<1x8x32xf32>
    %44 = vector.broadcast %42 : vector<8x1x32xf32> to vector<8x8x32xf32>
    %45 = vector.broadcast %43 : vector<1x8x32xf32> to vector<8x8x32xf32>
    %46 = arith.mulf %44, %45 : vector<8x8x32xf32>
    %47 = vector.shape_cast %46 : vector<8x8x32xf32> to vector<64x32xf32>
    %cst_14 = arith.constant dense<0.000000e+00> : vector<64x4xf32>
    %48 = tpu.matmul %47, %9, %cst_14 {dimension_numbers = #tpu.dot_dimension_numbers<[1], [0], [0], [1], [0, 0, 1, 1], [], []>} : vector<64x32xf32>, vector<32x4xf32>, vector<64x4xf32> -> vector<64x4xf32>
    %49 = vector.shape_cast %48 : vector<64x4xf32> to vector<8x8x4xf32>
    %cst_15 = arith.constant dense<0xFF800000> : vector<8x4xf32>
    %50 = vector.multi_reduction <maximumf>, %49, %cst_15 [1] : vector<8x8x4xf32> to vector<8x4xf32>
    %51 = vector.shape_cast %50 : vector<8x4xf32> to vector<8x1x4xf32>
    %52 = vector.broadcast %51 : vector<8x1x4xf32> to vector<8x8x4xf32>
    %53 = arith.subf %49, %52 : vector<8x8x4xf32>
    %54 = math.exp %53 : vector<8x8x4xf32>
    %cst_16 = arith.constant dense<0.000000e+00> : vector<8x4xf32>
    %55 = vector.multi_reduction <add>, %54, %cst_16 [1] : vector<8x8x4xf32> to vector<8x4xf32>
    %56 = vector.shape_cast %55 : vector<8x4xf32> to vector<8x1x4xf32>
    %57 = tpu.reciprocal %56 {approx = true} : vector<8x1x4xf32> -> vector<8x1x4xf32>
    %58 = vector.broadcast %57 : vector<8x1x4xf32> to vector<8x8x4xf32>
    %59 = arith.mulf %54, %58 : vector<8x8x4xf32>
    %60 = vector.shape_cast %59 : vector<8x8x4xf32> to vector<64x4xf32>
    %cst_17 = arith.constant dense<0.000000e+00> : vector<64x32xf32>
    %61 = tpu.matmul %60, %10, %cst_17 {dimension_numbers = #tpu.dot_dimension_numbers<[1], [0], [0], [1], [0, 0, 1, 1], [], []>} : vector<64x4xf32>, vector<4x32xf32>, vector<64x32xf32> -> vector<64x32xf32>
    %62 = vector.shape_cast %61 : vector<64x32xf32> to vector<8x8x32xf32>
    %63 = vector.shape_cast %41 : vector<8x32xf32> to vector<1x8x32xf32>
    %64 = vector.broadcast %63 : vector<1x8x32xf32> to vector<8x8x32xf32>
    %65 = arith.mulf %62, %64 : vector<8x8x32xf32>
    %cst_18 = arith.constant dense<0.000000e+00> : vector<8x32xf32>
    %66 = vector.multi_reduction <add>, %65, %cst_18 [1] : vector<8x8x32xf32> to vector<8x32xf32>
    %67 = tpu.concatenate %38, %66 in 0 : vector<8x32xf32>, vector<8x32xf32> -> vector<16x32xf32>
    %c0_19 = arith.constant 0 : index
    %c0_20 = arith.constant 0 : index
    %68 = vector.load %arg5[%c0_19, %c0_20] : memref<32x32xf32, #tpu.memory_space<vmem>>, vector<32x32xf32>
    %cst_21 = arith.constant dense<0.000000e+00> : vector<16x32xf32>
    %69 = tpu.matmul %67, %68, %cst_21 {dimension_numbers = #tpu.dot_dimension_numbers<[1], [0], [0], [1], [0, 0, 1, 1], [], []>} : vector<16x32xf32>, vector<32x32xf32>, vector<16x32xf32> -> vector<16x32xf32>
    %c0_22 = arith.constant 0 : index
    %c0_23 = arith.constant 0 : index
    %70 = vector.load %arg6[%c0_22, %c0_23] : memref<1x32xf32, #tpu.memory_space<vmem>>, vector<1x32xf32>
    %71 = vector.broadcast %70 : vector<1x32xf32> to vector<16x32xf32>
    %72 = arith.addf %69, %71 : vector<16x32xf32>
    %73 = arith.addf %72, %0 : vector<16x32xf32>
    %c0_24 = arith.constant 0 : index
    %c0_25 = arith.constant 0 : index
    %74 = vector.load %arg7[%c0_24, %c0_25] : memref<1x32xf32, #tpu.memory_space<vmem>>, vector<1x32xf32>
    %c0_26 = arith.constant 0 : index
    %c0_27 = arith.constant 0 : index
    %75 = vector.load %arg8[%c0_26, %c0_27] : memref<1x32xf32, #tpu.memory_space<vmem>>, vector<1x32xf32>
    %cst_28 = arith.constant dense<0.000000e+00> : vector<16xf32>
    %76 = vector.multi_reduction <add>, %73, %cst_28 [1] : vector<16x32xf32> to vector<16xf32>
    %77 = vector.shape_cast %76 : vector<16xf32> to vector<16x1xf32>
    %cst_29 = arith.constant 3.200000e+01 : f32
    %78 = vector.broadcast %cst_29 : f32 to vector<16x1xf32>
    %79 = arith.divf %77, %78 : vector<16x1xf32>
    %80 = vector.broadcast %79 : vector<16x1xf32> to vector<16x32xf32>
    %81 = arith.subf %73, %80 : vector<16x32xf32>
    %82 = arith.mulf %81, %81 : vector<16x32xf32>
    %cst_30 = arith.constant dense<0.000000e+00> : vector<16xf32>
    %83 = vector.multi_reduction <add>, %82, %cst_30 [1] : vector<16x32xf32> to vector<16xf32>
    %84 = vector.shape_cast %83 : vector<16xf32> to vector<16x1xf32>
    %cst_31 = arith.constant 3.200000e+01 : f32
    %85 = vector.broadcast %cst_31 : f32 to vector<16x1xf32>
    %86 = arith.divf %84, %85 : vector<16x1xf32>
    %87 = vector.broadcast %79 : vector<16x1xf32> to vector<16x32xf32>
    %88 = arith.subf %73, %87 : vector<16x32xf32>
    %cst_32 = arith.constant 9.99999974E-6 : f32
    %89 = vector.broadcast %cst_32 : f32 to vector<16x1xf32>
    %90 = arith.addf %86, %89 : vector<16x1xf32>
    %91 = math.rsqrt %90 : vector<16x1xf32>
    %92 = vector.broadcast %91 : vector<16x1xf32> to vector<16x32xf32>
    %93 = arith.mulf %88, %92 : vector<16x32xf32>
    %94 = vector.broadcast %74 : vector<1x32xf32> to vector<16x32xf32>
    %95 = arith.mulf %93, %94 : vector<16x32xf32>
    %96 = vector.broadcast %75 : vector<1x32xf32> to vector<16x32xf32>
    %97 = arith.addf %95, %96 : vector<16x32xf32>
    %c0_33 = arith.constant 0 : index
    %c0_34 = arith.constant 0 : index
    %98 = vector.load %arg9[%c0_33, %c0_34] : memref<32x64xf32, #tpu.memory_space<vmem>>, vector<32x64xf32>
    %cst_35 = arith.constant dense<0.000000e+00> : vector<16x64xf32>
    %99 = tpu.matmul %97, %98, %cst_35 {dimension_numbers = #tpu.dot_dimension_numbers<[1], [0], [0], [1], [0, 0, 1, 1], [], []>} : vector<16x32xf32>, vector<32x64xf32>, vector<16x64xf32> -> vector<16x64xf32>
    %c0_36 = arith.constant 0 : index
    %c0_37 = arith.constant 0 : index
    %100 = vector.load %arg10[%c0_36, %c0_37] : memref<1x64xf32, #tpu.memory_space<vmem>>, vector<1x64xf32>
    %101 = vector.broadcast %100 : vector<1x64xf32> to vector<16x64xf32>
    %102 = arith.addf %99, %101 : vector<16x64xf32>
    %cst_38 = arith.constant 0.000000e+00 : f32
    %103 = vector.broadcast %cst_38 : f32 to vector<16x64xf32>
    %104 = arith.maximumf %102, %103 : vector<16x64xf32>
    %c0_39 = arith.constant 0 : index
    %c0_40 = arith.constant 0 : index
    %105 = vector.load %arg11[%c0_39, %c0_40] : memref<64x32xf32, #tpu.memory_space<vmem>>, vector<64x32xf32>
    %cst_41 = arith.constant dense<0.000000e+00> : vector<16x32xf32>
    %106 = tpu.matmul %104, %105, %cst_41 {dimension_numbers = #tpu.dot_dimension_numbers<[1], [0], [0], [1], [0, 0, 1, 1], [], []>} : vector<16x64xf32>, vector<64x32xf32>, vector<16x32xf32> -> vector<16x32xf32>
    %c0_42 = arith.constant 0 : index
    %c0_43 = arith.constant 0 : index
    %107 = vector.load %arg12[%c0_42, %c0_43] : memref<1x32xf32, #tpu.memory_space<vmem>>, vector<1x32xf32>
    %108 = vector.broadcast %107 : vector<1x32xf32> to vector<16x32xf32>
    %109 = arith.addf %106, %108 : vector<16x32xf32>
    %110 = arith.addf %109, %97 : vector<16x32xf32>
    %c0_44 = arith.constant 0 : index
    %c0_45 = arith.constant 0 : index
    %111 = vector.load %arg13[%c0_44, %c0_45] : memref<1x32xf32, #tpu.memory_space<vmem>>, vector<1x32xf32>
    %c0_46 = arith.constant 0 : index
    %c0_47 = arith.constant 0 : index
    %112 = vector.load %arg14[%c0_46, %c0_47] : memref<1x32xf32, #tpu.memory_space<vmem>>, vector<1x32xf32>
    %cst_48 = arith.constant dense<0.000000e+00> : vector<16xf32>
    %113 = vector.multi_reduction <add>, %110, %cst_48 [1] : vector<16x32xf32> to vector<16xf32>
    %114 = vector.shape_cast %113 : vector<16xf32> to vector<16x1xf32>
    %cst_49 = arith.constant 3.200000e+01 : f32
    %115 = vector.broadcast %cst_49 : f32 to vector<16x1xf32>
    %116 = arith.divf %114, %115 : vector<16x1xf32>
    %117 = vector.broadcast %116 : vector<16x1xf32> to vector<16x32xf32>
    %118 = arith.subf %110, %117 : vector<16x32xf32>
    %119 = arith.mulf %118, %118 : vector<16x32xf32>
    %cst_50 = arith.constant dense<0.000000e+00> : vector<16xf32>
    %120 = vector.multi_reduction <add>, %119, %cst_50 [1] : vector<16x32xf32> to vector<16xf32>
    %121 = vector.shape_cast %120 : vector<16xf32> to vector<16x1xf32>
    %cst_51 = arith.constant 3.200000e+01 : f32
    %122 = vector.broadcast %cst_51 : f32 to vector<16x1xf32>
    %123 = arith.divf %121, %122 : vector<16x1xf32>
    %124 = vector.broadcast %116 : vector<16x1xf32> to vector<16x32xf32>
    %125 = arith.subf %110, %124 : vector<16x32xf32>
    %cst_52 = arith.constant 9.99999974E-6 : f32
    %126 = vector.broadcast %cst_52 : f32 to vector<16x1xf32>
    %127 = arith.addf %123, %126 : vector<16x1xf32>
    %128 = math.rsqrt %127 : vector<16x1xf32>
    %129 = vector.broadcast %128 : vector<16x1xf32> to vector<16x32xf32>
    %130 = arith.mulf %125, %129 : vector<16x32xf32>
    %131 = vector.broadcast %111 : vector<1x32xf32> to vector<16x32xf32>
    %132 = arith.mulf %130, %131 : vector<16x32xf32>
    %133 = vector.broadcast %112 : vector<1x32xf32> to vector<16x32xf32>
    %134 = arith.addf %132, %133 : vector<16x32xf32>
    %c0_53 = arith.constant 0 : index
    %c0_54 = arith.constant 0 : index
    %135 = vector.load %arg15[%c0_53, %c0_54] : memref<16x32xf32, #tpu.memory_space<vmem>>, vector<16x32xf32>
    tpu.vector_store %arg15[%c0_53, %c0_54], %134 {strides = array<i32>} : memref<16x32xf32, #tpu.memory_space<vmem>>, vector<16x32xf32>,
    return
  }
}

</mosaic_0001>

<llo_original>
// kernel: encoder_layer.1
$region0: #{encoder_layer.1}
  #allocation0 [shape = 'u32[]', space=smem, size = 0x4, offset = 0x4, fixed_abs, tag = 'smem constant byte address 0x4 - core index']
  #allocation1 [shape = 'u32[72,128]{1,0:T(1,128)}', space=vmem, size = 0x9000, scoped, tag = 'internal scratch']
  %s0 = inlined_call_operand.vmem [shape: f32[16,32], index: 0, kind: input, shape index: {}]
  %s1 = inlined_call_operand.vmem [shape: f32[32,96], index: 1, kind: input, shape index: {}]
  %s2 = inlined_call_operand.hbm [shape: f32[1,96], index: 2, kind: input, shape index: {}]
  %s3 = inlined_call_operand.vmem [shape: f32[32,4], index: 3, kind: input, shape index: {}]
  %s4 = inlined_call_operand.hbm [shape: f32[4,32], index: 4, kind: input, shape index: {}]
  %s5 = inlined_call_operand.vmem [shape: f32[32,32], index: 5, kind: input, shape index: {}]
  %s6 = inlined_call_operand.hbm [shape: f32[1,32], index: 6, kind: input, shape index: {}]
  %s7 = inlined_call_operand.hbm [shape: f32[1,32], index: 7, kind: input, shape index: {}]
  %s8 = inlined_call_operand.hbm [shape: f32[1,32], index: 8, kind: input, shape index: {}]
  %s9 = inlined_call_operand.vmem [shape: f32[32,64], index: 9, kind: input, shape index: {}]
  %s10 = inlined_call_operand.hbm [shape: f32[1,64], index: 10, kind: input, shape index: {}]
  %s11 = inlined_call_operand.vmem [shape: f32[64,32], index: 11, kind: input, shape index: {}]
  %s12 = inlined_call_operand.hbm [shape: f32[1,32], index: 12, kind: input, shape index: {}]
  %s13 = inlined_call_operand.hbm [shape: f32[1,32], index: 13, kind: input, shape index: {}]
  %s14 = inlined_call_operand.hbm [shape: f32[1,32], index: 14, kind: input, shape index: {}]
  %s15 = inlined_call_operand.hbm [shape: f32[16,32], index: 15, kind: output, shape index: {}]
  %s16 = sld [smem:[#allocation0]]
  $region106: #{encoder_layer.1} parent=0
    _
  %s18 = ssub.s32 1, %s16
  %s19 = scalar_select 0, %s18, %s16
  $region1: #{encoder_layer.1} parent=0
    #allocation2 [shape = 'u8[512]{0}', space=vmem, size = 0x400, scoped, tag = 'input window, operand 2, single buffered']
    #allocation3 [shape = 's32[1]{0}', space=sflag, size = 0x4, scoped, tag = 'scoped memory for encoder_layer.1']
    #allocation4 [shape = 's32[1]{0}', space=sflag, size = 0x4, scoped, tag = 'scoped memory for encoder_layer.1']
    #allocation5 [shape = 'u8[2048]{0}', space=vmem, size = 0x800, scoped, tag = 'input window, operand 4, single buffered']
    #allocation6 [shape = 's32[1]{0}', space=sflag, size = 0x4, scoped, tag = 'scoped memory for encoder_layer.1']
    #allocation7 [shape = 'u8[512]{0}', space=vmem, size = 0x400, scoped, tag = 'input window, operand 6, single buffered']
    #allocation8 [shape = 'u8[512]{0}', space=vmem, size = 0x400, scoped, tag = 'input window, operand 7, single buffered']
    #allocation9 [shape = 's32[1]{0}', space=sflag, size = 0x4, scoped, tag = 'scoped memory for encoder_layer.1']
    #allocation10 [shape = 'u8[512]{0}', space=vmem, size = 0x400, scoped, tag = 'input window, operand 8, single buffered']
    #allocation11 [shape = 'u8[512]{0}', space=vmem, size = 0x400, scoped, tag = 'input window, operand 10, single buffered']
    #allocation12 [shape = 's32[1]{0}', space=sflag, size = 0x4, scoped, tag = 'scoped memory for encoder_layer.1']
    #allocation13 [shape = 'u8[512]{0}', space=vmem, size = 0x400, scoped, tag = 'input window, operand 12, single buffered']
    #allocation14 [shape = 'u8[512]{0}', space=vmem, size = 0x400, scoped, tag = 'input window, operand 13, single buffered']
    #allocation15 [shape = 's32[1]{0}', space=sflag, size = 0x4, scoped, tag = 'scoped memory for encoder_layer.1']
    #allocation16 [shape = 'u8[512]{0}', space=vmem, size = 0x400, scoped, tag = 'input window, operand 14, single buffered']
    #allocation17 [shape = 'u8[8192]{0}', space=vmem, size = 0x2000, scoped, tag = 'output window, operand 0, single buffered']
    %20 = vsyncpa [#allocation3], 0
    %21 = vsyncpa [#allocation6], 0
    %22 = vsyncpa [#allocation9], 0
    %23 = vsyncpa [#allocation12], 0
    %24 = vsyncpa [#allocation15], 0
    %25 = vsyncpa [#allocation4], 0
    // Predicated region
    $region2: #{encoder_layer.1} parent=1 // pred_check
      _
    $region3: #{encoder_layer.1} parent=1 // pred_check_branch
      %27 = sbr.rel (0) target = $region5
    $region4: #{encoder_layer.1} parent=1 // pred_region
      _
    $region5: #{encoder_layer.1} parent=1 // pred_fallthru
      _
    // Predicated region
    $region6: #{encoder_layer.1} parent=1 // pred_check
      _
    $region7: #{encoder_layer.1} parent=1 // pred_check_branch
      %29 = sbr.rel (0) target = $region9
    $region8: #{encoder_layer.1} parent=1 // pred_region
      _
    $region9: #{encoder_layer.1} parent=1 // pred_fallthru
      _
    // Predicated region
    $region10: #{encoder_layer.1} parent=1 // pred_check
      _
    $region11: #{encoder_layer.1} parent=1 // pred_check_branch
      %31 = sbr.rel (0) target = $region13
    $region12: #{encoder_layer.1} parent=1 // pred_region
      %33 = vsyncadd [#allocation3], 0
      %s35 = sshll.u32 %s2, 4
      %s36 = int_to_ptr.hbm [resolvable:$true] %s35
      %s37 = sshll.u32 [#allocation2], 4
      %s38 = int_to_ptr.vmem [resolvable:$true] %s37
      %40 = dma.hbm_to_vmem [thread:$0]  %s36, 16, %s38, [#allocation3]
    $region13: #{encoder_layer.1} parent=1 // pred_fallthru
      _
    // Predicated region
    $region14: #{encoder_layer.1} parent=1 // pred_check
      _
    $region15: #{encoder_layer.1} parent=1 // pred_check_branch
      %42 = sbr.rel (0) target = $region17
    $region16: #{encoder_layer.1} parent=1 // pred_region
      _
    $region17: #{encoder_layer.1} parent=1 // pred_fallthru
      _
    // Predicated region
    $region18: #{encoder_layer.1} parent=1 // pred_check
      _
    $region19: #{encoder_layer.1} parent=1 // pred_check_branch
      %44 = sbr.rel (0) target = $region21
    $region20: #{encoder_layer.1} parent=1 // pred_region
      %46 = vsyncadd [#allocation6], 0
      %s48 = sshll.u32 %s4, 4
      %s49 = int_to_ptr.hbm [resolvable:$true] %s48
      %s50 = sshll.u32 [#allocation5], 4
      %s51 = int_to_ptr.vmem [resolvable:$true] %s50
      %53 = dma.hbm_to_vmem [thread:$0]  %s49, 64, %s51, [#allocation6]
    $region21: #{encoder_layer.1} parent=1 // pred_fallthru
      _
    // Predicated region
    $region22: #{encoder_layer.1} parent=1 // pred_check
      _
    $region23: #{encoder_layer.1} parent=1 // pred_check_branch
      %55 = sbr.rel (0) target = $region25
    $region24: #{encoder_layer.1} parent=1 // pred_region
      _
    $region25: #{encoder_layer.1} parent=1 // pred_fallthru
      _
    // Predicated region
    $region26: #{encoder_layer.1} parent=1 // pred_check
      _
    $region27: #{encoder_layer.1} parent=1 // pred_check_branch
      %57 = sbr.rel (0) target = $region29
    $region28: #{encoder_layer.1} parent=1 // pred_region
      %59 = vsyncadd [#allocation6], 0
      %s61 = sshll.u32 %s6, 4
      %s62 = int_to_ptr.hbm [resolvable:$true] %s61
      %s63 = sshll.u32 [#allocation7], 4
      %s64 = int_to_ptr.vmem [resolvable:$true] %s63
      %66 = dma.hbm_to_vmem [thread:$0]  %s62, 16, %s64, [#allocation6]
    $region29: #{encoder_layer.1} parent=1 // pred_fallthru
      _
    // Predicated region
    $region30: #{encoder_layer.1} parent=1 // pred_check
      _
    $region31: #{encoder_layer.1} parent=1 // pred_check_branch
      %68 = sbr.rel (0) target = $region33
    $region32: #{encoder_layer.1} parent=1 // pred_region
      %70 = vsyncadd [#allocation9], 0
      %s72 = sshll.u32 %s7, 4
      %s73 = int_to_ptr.hbm [resolvable:$true] %s72
      %s74 = sshll.u32 [#allocation8], 4
      %s75 = int_to_ptr.vmem [resolvable:$true] %s74
      %77 = dma.hbm_to_vmem [thread:$0]  %s73, 16, %s75, [#allocation9]
    $region33: #{encoder_layer.1} parent=1 // pred_fallthru
      _
    // Predicated region
    $region34: #{encoder_layer.1} parent=1 // pred_check
      _
    $region35: #{encoder_layer.1} parent=1 // pred_check_branch
      %79 = sbr.rel (0) target = $region37
    $region36: #{encoder_layer.1} parent=1 // pred_region
      %81 = vsyncadd [#allocation9], 0
      %s83 = sshll.u32 %s8, 4
      %s84 = int_to_ptr.hbm [resolvable:$true] %s83
      %s85 = sshll.u32 [#allocation10], 4
      %s86 = int_to_ptr.vmem [resolvable:$true] %s85
      %88 = dma.hbm_to_vmem [thread:$0]  %s84, 16, %s86, [#allocation9]
    $region37: #{encoder_layer.1} parent=1 // pred_fallthru
      _
    // Predicated region
    $region38: #{encoder_layer.1} parent=1 // pred_check
      _
    $region39: #{encoder_layer.1} parent=1 // pred_check_branch
      %90 = sbr.rel (0) target = $region41
    $region40: #{encoder_layer.1} parent=1 // pred_region
      _
    $region41: #{encoder_layer.1} parent=1 // pred_fallthru
      _
    // Predicated region
    $region42: #{encoder_layer.1} parent=1 // pred_check
      _
    $region43: #{encoder_layer.1} parent=1 // pred_check_branch
      %92 = sbr.rel (0) target = $region45
    $region44: #{encoder_layer.1} parent=1 // pred_region
      %94 = vsyncadd [#allocation12], 0
      %s96 = sshll.u32 %s10, 4
      %s97 = int_to_ptr.hbm [resolvable:$true] %s96
      %s98 = sshll.u32 [#allocation11], 4
      %s99 = int_to_ptr.vmem [resolvable:$true] %s98
      %101 = dma.hbm_to_vmem [thread:$0]  %s97, 16, %s99, [#allocation12]
    $region45: #{encoder_layer.1} parent=1 // pred_fallthru
      _
    // Predicated region
    $region46: #{encoder_layer.1} parent=1 // pred_check
      _
    $region47: #{encoder_layer.1} parent=1 // pred_check_branch
      %103 = sbr.rel (0) target = $region49
    $region48: #{encoder_layer.1} parent=1 // pred_region
      _
    $region49: #{encoder_layer.1} parent=1 // pred_fallthru
      _
    // Predicated region
    $region50: #{encoder_layer.1} parent=1 // pred_check
      _
    $region51: #{encoder_layer.1} parent=1 // pred_check_branch
      %105 = sbr.rel (0) target = $region53
    $region52: #{encoder_layer.1} parent=1 // pred_region
      %107 = vsyncadd [#allocation12], 0
      %s109 = sshll.u32 %s12, 4
      %s110 = int_to_ptr.hbm [resolvable:$true] %s109
      %s111 = sshll.u32 [#allocation13], 4
      %s112 = int_to_ptr.vmem [resolvable:$true] %s111
      %114 = dma.hbm_to_vmem [thread:$0]  %s110, 16, %s112, [#allocation12]
    $region53: #{encoder_layer.1} parent=1 // pred_fallthru
      _
    // Predicated region
    $region54: #{encoder_layer.1} parent=1 // pred_check
      _
    $region55: #{encoder_layer.1} parent=1 // pred_check_branch
      %116 = sbr.rel (0) target = $region57
    $region56: #{encoder_layer.1} parent=1 // pred_region
      %118 = vsyncadd [#allocation15], 0
      %s120 = sshll.u32 %s13, 4
      %s121 = int_to_ptr.hbm [resolvable:$true] %s120
      %s122 = sshll.u32 [#allocation14], 4
      %s123 = int_to_ptr.vmem [resolvable:$true] %s122
      %125 = dma.hbm_to_vmem [thread:$0]  %s121, 16, %s123, [#allocation15]
    $region57: #{encoder_layer.1} parent=1 // pred_fallthru
      _
    // Predicated region
    $region58: #{encoder_layer.1} parent=1 // pred_check
      _
    $region59: #{encoder_layer.1} parent=1 // pred_check_branch
      %127 = sbr.rel (0) target = $region61
    $region60: #{encoder_layer.1} parent=1 // pred_region
      %129 = vsyncadd [#allocation15], 0
      %s131 = sshll.u32 %s14, 4
      %s132 = int_to_ptr.hbm [resolvable:$true] %s131
      %s133 = sshll.u32 [#allocation16], 4
      %s134 = int_to_ptr.vmem [resolvable:$true] %s133
      %136 = dma.hbm_to_vmem [thread:$0]  %s132, 16, %s134, [#allocation15]
    $region61: #{encoder_layer.1} parent=1 // pred_fallthru
      _
    // Predicated region
    $region62: #{encoder_layer.1} parent=1 // pred_check
      _
    $region63: #{encoder_layer.1} parent=1 // pred_check_branch
      %138 = sbr.rel (0) target = $region65
    $region64: #{encoder_layer.1} parent=1 // pred_region
      %140 = dma.done [#allocation3], 16
    $region65: #{encoder_layer.1} parent=1 // pred_fallthru
      _
    // Predicated region
    $region66: #{encoder_layer.1} parent=1 // pred_check
      _
    $region67: #{encoder_layer.1} parent=1 // pred_check_branch
      %142 = sbr.rel (0) target = $region69
    $region68: #{encoder_layer.1} parent=1 // pred_region
      %144 = dma.done [#allocation6], 64
    $region69: #{encoder_layer.1} parent=1 // pred_fallthru
      _
    // Predicated region
    $region70: #{encoder_layer.1} parent=1 // pred_check
      _
    $region71: #{encoder_layer.1} parent=1 // pred_check_branch
      %146 = sbr.rel (0) target = $region73
    $region72: #{encoder_layer.1} parent=1 // pred_region
      %148 = dma.done [#allocation6], 16
    $region73: #{encoder_layer.1} parent=1 // pred_fallthru
      _
    // Predicated region
    $region74: #{encoder_layer.1} parent=1 // pred_check
      _
    $region75: #{encoder_layer.1} parent=1 // pred_check_branch
      %150 = sbr.rel (0) target = $region77
    $region76: #{encoder_layer.1} parent=1 // pred_region
      %152 = dma.done [#allocation9], 16
    $region77: #{encoder_layer.1} parent=1 // pred_fallthru
      _
    // Predicated region
    $region78: #{encoder_layer.1} parent=1 // pred_check
      _
    $region79: #{encoder_layer.1} parent=1 // pred_check_branch
      %154 = sbr.rel (0) target = $region81
    $region80: #{encoder_layer.1} parent=1 // pred_region
      %156 = dma.done [#allocation9], 16
    $region81: #{encoder_layer.1} parent=1 // pred_fallthru
      _
    // Predicated region
    $region82: #{encoder_layer.1} parent=1 // pred_check
      _
    $region83: #{encoder_layer.1} parent=1 // pred_check_branch
      %158 = sbr.rel (0) target = $region85
    $region84: #{encoder_layer.1} parent=1 // pred_region
      %160 = dma.done [#allocation12], 16
    $region85: #{encoder_layer.1} parent=1 // pred_fallthru
      _
    // Predicated region
    $region86: #{encoder_layer.1} parent=1 // pred_check
      _
    $region87: #{encoder_layer.1} parent=1 // pred_check_branch
      %162 = sbr.rel (0) target = $region89
    $region88: #{encoder_layer.1} parent=1 // pred_region
      %164 = dma.done [#allocation12], 16
    $region89: #{encoder_layer.1} parent=1 // pred_fallthru
      _
    // Predicated region
    $region90: #{encoder_layer.1} parent=1 // pred_check
      _
    $region91: #{encoder_layer.1} parent=1 // pred_check_branch
      %166 = sbr.rel (0) target = $region93
    $region92: #{encoder_layer.1} parent=1 // pred_region
      %168 = dma.done [#allocation15], 16
    $region93: #{encoder_layer.1} parent=1 // pred_fallthru
      _
    // Predicated region
    $region94: #{encoder_layer.1} parent=1 // pred_check
      _
    $region95: #{encoder_layer.1} parent=1 // pred_check_branch
      %170 = sbr.rel (0) target = $region97
    $region96: #{encoder_layer.1} parent=1 // pred_region
      %172 = dma.done [#allocation15], 16
    $region97: #{encoder_layer.1} parent=1 // pred_fallthru
      _
    %v173 = vld [vmem:[%s0] sm:$0xff]
    %v174 = vld [vmem:[%s0 + $0x8] sm:$0xff]
    %v175 = vld [vmem:[%s1] sm:$0xff]
    %v176 = vld [vmem:[%s1 + $0x8] sm:$0xff]
    %v177 = vld [vmem:[%s1 + $0x10] sm:$0xff]
    %v178 = vld [vmem:[%s1 + $0x18] sm:$0xff]
    %v179 = vld [vmem:[#allocation2] sm:$0x1]
    %v181 = vperm.slane %v179, 0
    %vm183 = vcmask 261120
    %v185 = vsel %vm183, %v173, 0
    %v188 = vsel %vm183, %v174, 0
    %190 = vmatpush.msra.mxu0 0.0
    %191 = vmatpush.msra.mxu0 0.0
    %192 = vmatpush.msra.mxu0 0.0
    %193 = vmatpush.msra.mxu0 0.0
    %194 = vmatpush.msra.mxu0 0.0
    %195 = vmatpush.msra.mxu0 0.0
    %196 = vmatpush.msra.mxu0 0.0
    %197 = vmatpush.msra.mxu0 0.0
    %198 = vmatpush.msra.mxu0 0.0
    %199 = vmatpush.msra.mxu0 0.0
    %200 = vmatpush.msra.mxu0 0.0
    %201 = vmatpush.msra.mxu0 0.0
    %202 = vmatpush.msra.mxu0 %v178
    %203 = vmatpush.msra.mxu0 %v177
    %204 = vmatpush.msra.mxu0 %v176
    %205 = vmatpush.msra.mxu0 %v175
    %206 = vmatmul.f32.gmra.mxu0 %v185
    %v207 = vpop.f32.mrf.mxu0
    %v208 = vadd.f32 %v181, %v207
    %209 = vmatmul.f32.gmra.mxu0 %v188
    %v210 = vpop.f32.mrf.mxu0
    %v211 = vadd.f32 %v181, %v210
    %212 = vdwg.mxu0
    %v213 = vld [vmem:[%s3] sm:$0xff]
    %v214 = vld [vmem:[%s3 + $0x8] sm:$0xff]
    %v215 = vld [vmem:[%s3 + $0x10] sm:$0xff]
    %v216 = vld [vmem:[%s3 + $0x18] sm:$0xff]
    %v217 = vld [vmem:[#allocation5] sm:$0xf]
    %v219 = vrot.slane %v208, 1
    %v220 = vrot.slane %v208, 2
    %v221 = vrot.slane %v208, 3
    %v222 = vrot.slane %v208, 4
    %v223 = vrot.slane %v208, 5
    %v224 = vrot.slane %v208, 6
    %v225 = vrot.slane %v208, 7
    %v226 = vperm.slane %v208, 0
    %v227 = vperm.slane %v219, 0
    %v228 = vperm.slane %v220, 0
    %v229 = vperm.slane %v221, 0
    %v230 = vperm.slane %v222, 0
    %v231 = vperm.slane %v223, 0
    %v232 = vperm.slane %v224, 0
    %v233 = vperm.slane %v225, 0
    %242 = vrot.lane.b32.xlu0 %v208, 96
    %v243 = vpop.permute.xlu0 %242
    %v245 = vmul.f32 %v226, %v243
    %v246 = vmul.f32 %v227, %v243
    %v247 = vmul.f32 %v228, %v243
    %v248 = vmul.f32 %v229, %v243
    %v249 = vmul.f32 %v230, %v243
    %v250 = vmul.f32 %v231, %v243
    %v251 = vmul.f32 %v232, %v243
    %v252 = vmul.f32 %v233, %v243
    %v254 = vsel %vm183, %v245, 0
    %v257 = vsel %vm183, %v246, 0
    %v260 = vsel %vm183, %v247, 0
    %v263 = vsel %vm183, %v248, 0
    %v266 = vsel %vm183, %v249, 0
    %v269 = vsel %vm183, %v250, 0
    %v272 = vsel %vm183, %v251, 0
    %v275 = vsel %vm183, %v252, 0
    %277 = vmatpush.msra.mxu0 0.0
    %278 = vmatpush.msra.mxu0 0.0
    %279 = vmatpush.msra.mxu0 0.0
    %280 = vmatpush.msra.mxu0 0.0
    %281 = vmatpush.msra.mxu0 0.0
    %282 = vmatpush.msra.mxu0 0.0
    %283 = vmatpush.msra.mxu0 0.0
    %284 = vmatpush.msra.mxu0 0.0
    %285 = vmatpush.msra.mxu0 0.0
    %286 = vmatpush.msra.mxu0 0.0
    %287 = vmatpush.msra.mxu0 0.0
    %288 = vmatpush.msra.mxu0 0.0
    %289 = vmatpush.msra.mxu0 %v216
    %290 = vmatpush.msra.mxu0 %v215
    %291 = vmatpush.msra.mxu0 %v214
    %292 = vmatpush.msra.mxu0 %v213
    %293 = vmatmul.f32.gmra.mxu0 %v254
    %v294 = vpop.f32.mrf.mxu0
    %v295 = vadd.f32 0.0, %v294
    %296 = vmatmul.f32.gmra.mxu0 %v257
    %v297 = vpop.f32.mrf.mxu0
    %v298 = vadd.f32 0.0, %v297
    %299 = vmatmul.f32.gmra.mxu0 %v260
    %v300 = vpop.f32.mrf.mxu0
    %v301 = vadd.f32 0.0, %v300
    %302 = vmatmul.f32.gmra.mxu0 %v263
    %v303 = vpop.f32.mrf.mxu0
    %v304 = vadd.f32 0.0, %v303
    %305 = vmatmul.f32.gmra.mxu0 %v266
    %v306 = vpop.f32.mrf.mxu0
    %v307 = vadd.f32 0.0, %v306
    %308 = vmatmul.f32.gmra.mxu0 %v269
    %v309 = vpop.f32.mrf.mxu0
    %v310 = vadd.f32 0.0, %v309
    %311 = vmatmul.f32.gmra.mxu0 %v272
    %v312 = vpop.f32.mrf.mxu0
    %v313 = vadd.f32 0.0, %v312
    %314 = vmatmul.f32.gmra.mxu0 %v275
    %v315 = vpop.f32.mrf.mxu0
    %v316 = vadd.f32 0.0, %v315
    %317 = vdwg.mxu0
    %vm318 = vcmask 31744
    %v319 = vsel %vm318, %v295, -inf
    %v320 = vrot.slane %v319, 4
    %v321 = vmax.f32 %v319, %v320
    %v322 = vrot.slane %v321, 2
    %v323 = vmax.f32 %v321, %v322
    %v324 = vrot.slane %v323, 1
    %v325 = vmax.f32 %v323, %v324
    %v326 = vsel %vm318, %v298, -inf
    %v327 = vrot.slane %v326, 4
    %v328 = vmax.f32 %v326, %v327
    %v329 = vrot.slane %v328, 2
    %v330 = vmax.f32 %v328, %v329
    %v331 = vrot.slane %v330, 1
    %v332 = vmax.f32 %v330, %v331
    %v333 = vsel %vm318, %v301, -inf
    %v334 = vrot.slane %v333, 4
    %v335 = vmax.f32 %v333, %v334
    %v336 = vrot.slane %v335, 2
    %v337 = vmax.f32 %v335, %v336
    %v338 = vrot.slane %v337, 1
    %v339 = vmax.f32 %v337, %v338
    %v340 = vsel %vm318, %v304, -inf
    %v341 = vrot.slane %v340, 4
    %v342 = vmax.f32 %v340, %v341
    %v343 = vrot.slane %v342, 2
    %v344 = vmax.f32 %v342, %v343
    %v345 = vrot.slane %v344, 1
    %v346 = vmax.f32 %v344, %v345
    %v347 = vsel %vm318, %v307, -inf
    %v348 = vrot.slane %v347, 4
    %v349 = vmax.f32 %v347, %v348
    %v350 = vrot.slane %v349, 2
    %v351 = vmax.f32 %v349, %v350
    %v352 = vrot.slane %v351, 1
    %v353 = vmax.f32 %v351, %v352
    %v354 = vsel %vm318, %v310, -inf
    %v355 = vrot.slane %v354, 4
    %v356 = vmax.f32 %v354, %v355
    %v357 = vrot.slane %v356, 2
    %v358 = vmax.f32 %v356, %v357
    %v359 = vrot.slane %v358, 1
    %v360 = vmax.f32 %v358, %v359
    %v361 = vsel %vm318, %v313, -inf
    %v362 = vrot.slane %v361, 4
    %v363 = vmax.f32 %v361, %v362
    %v364 = vrot.slane %v363, 2
    %v365 = vmax.f32 %v363, %v364
    %v366 = vrot.slane %v365, 1
    %v367 = vmax.f32 %v365, %v366
    %v368 = vsel %vm318, %v316, -inf
    %v369 = vrot.slane %v368, 4
    %v370 = vmax.f32 %v368, %v369
    %v371 = vrot.slane %v370, 2
    %v372 = vmax.f32 %v370, %v371
    %v373 = vrot.slane %v372, 1
    %v374 = vmax.f32 %v372, %v373
    %v375 = vsub.f32 %v295, %v325
    %v376 = vsub.f32 %v298, %v332
    %v377 = vsub.f32 %v301, %v339
    %v378 = vsub.f32 %v304, %v346
    %v379 = vsub.f32 %v307, %v353
    %v380 = vsub.f32 %v310, %v360
    %v381 = vsub.f32 %v313, %v367
    %v382 = vsub.f32 %v316, %v374
    %v383 = vmul.f32 %v375, 1.442695
    %v384 = vpow.pop %v383
    %v385 = vmul.f32 %v376, 1.442695
    %v386 = vpow.pop %v385
    %v387 = vmul.f32 %v377, 1.442695
    %v388 = vpow.pop %v387
    %v389 = vmul.f32 %v378, 1.442695
    %v390 = vpow.pop %v389
    %v391 = vmul.f32 %v379, 1.442695
    %v392 = vpow.pop %v391
    %v393 = vmul.f32 %v380, 1.442695
    %v394 = vpow.pop %v393
    %v395 = vmul.f32 %v381, 1.442695
    %v396 = vpow.pop %v395
    %v397 = vmul.f32 %v382, 1.442695
    %v398 = vpow.pop %v397
    %v399 = vsel %vm318, %v384, 0.0
    %v400 = vrot.slane %v399, 4
    %v401 = vadd.f32 %v399, %v400
    %v402 = vrot.slane %v401, 2
    %v403 = vadd.f32 %v401, %v402
    %v404 = vrot.slane %v403, 1
    %v405 = vadd.f32 %v403, %v404
    %v406 = vsel %vm318, %v386, 0.0
    %v407 = vrot.slane %v406, 4
    %v408 = vadd.f32 %v406, %v407
    %v409 = vrot.slane %v408, 2
    %v410 = vadd.f32 %v408, %v409
    %v411 = vrot.slane %v410, 1
    %v412 = vadd.f32 %v410, %v411
    %v413 = vsel %vm318, %v388, 0.0
    %v414 = vrot.slane %v413, 4
    %v415 = vadd.f32 %v413, %v414
    %v416 = vrot.slane %v415, 2
    %v417 = vadd.f32 %v415, %v416
    %v418 = vrot.slane %v417, 1
    %v419 = vadd.f32 %v417, %v418
    %v420 = vsel %vm318, %v390, 0.0
    %v421 = vrot.slane %v420, 4
    %v422 = vadd.f32 %v420, %v421
    %v423 = vrot.slane %v422, 2
    %v424 = vadd.f32 %v422, %v423
    %v425 = vrot.slane %v424, 1
    %v426 = vadd.f32 %v424, %v425
    %v427 = vsel %vm318, %v392, 0.0
    %v428 = vrot.slane %v427, 4
    %v429 = vadd.f32 %v427, %v428
    %v430 = vrot.slane %v429, 2
    %v431 = vadd.f32 %v429, %v430
    %v432 = vrot.slane %v431, 1
    %v433 = vadd.f32 %v431, %v432
    %v434 = vsel %vm318, %v394, 0.0
    %v435 = vrot.slane %v434, 4
    %v436 = vadd.f32 %v434, %v435
    %v437 = vrot.slane %v436, 2
    %v438 = vadd.f32 %v436, %v437
    %v439 = vrot.slane %v438, 1
    %v440 = vadd.f32 %v438, %v439
    %v441 = vsel %vm318, %v396, 0.0
    %v442 = vrot.slane %v441, 4
    %v443 = vadd.f32 %v441, %v442
    %v444 = vrot.slane %v443, 2
    %v445 = vadd.f32 %v443, %v444
    %v446 = vrot.slane %v445, 1
    %v447 = vadd.f32 %v445, %v446
    %v448 = vsel %vm318, %v398, 0.0
    %v449 = vrot.slane %v448, 4
    %v450 = vadd.f32 %v448, %v449
    %v451 = vrot.slane %v450, 2
    %v452 = vadd.f32 %v450, %v451
    %v453 = vrot.slane %v452, 1
    %v454 = vadd.f32 %v452, %v453
    %v455 = vrcp.pop %v405
    %v456 = vrcp.pop %v412
    %v457 = vrcp.pop %v419
    %v458 = vrcp.pop %v426
    %v459 = vrcp.pop %v433
    %v460 = vrcp.pop %v440
    %v461 = vrcp.pop %v447
    %v462 = vrcp.pop %v454
    %v463 = vmul.f32 %v384, %v455
    %v464 = vmul.f32 %v386, %v456
    %v465 = vmul.f32 %v388, %v457
    %v466 = vmul.f32 %v390, %v458
    %v467 = vmul.f32 %v392, %v459
    %v468 = vmul.f32 %v394, %v460
    %v469 = vmul.f32 %v396, %v461
    %v470 = vmul.f32 %v398, %v462
    %v472 = vsel %vm318, %v463, 0
    %v475 = vsel %vm318, %v464, 0
    %v478 = vsel %vm318, %v465, 0
    %v481 = vsel %vm318, %v466, 0
    %v484 = vsel %vm318, %v467, 0
    %v487 = vsel %vm318, %v468, 0
    %v490 = vsel %vm318, %v469, 0
    %v493 = vsel %vm318, %v470, 0
    %vm495 = vcmask 1043456
    %v497 = vsel %vm495, %v217, 0
    %499 = vmatpush.msra.mxu0 0.0
    %500 = vmatpush.msra.mxu0 0.0
    %501 = vmatpush.msra.mxu0 0.0
    %502 = vmatpush.msra.mxu0 0.0
    %503 = vmatpush.msra.mxu0 0.0
    %504 = vmatpush.msra.mxu0 0.0
    %505 = vmatpush.msra.mxu0 0.0
    %506 = vmatpush.msra.mxu0 0.0
    %507 = vmatpush.msra.mxu0 0.0
    %508 = vmatpush.msra.mxu0 0.0
    %509 = vmatpush.msra.mxu0 0.0
    %510 = vmatpush.msra.mxu0 0.0
    %511 = vmatpush.msra.mxu0 0.0
    %512 = vmatpush.msra.mxu0 0.0
    %513 = vmatpush.msra.mxu0 0.0
    %514 = vmatpush.msra.mxu0 %v497
    %515 = vmatmul.f32.gmra.mxu0 %v472
    %v516 = vpop.f32.mrf.mxu0
    %v517 = vadd.f32 0.0, %v516
    %518 = vmatmul.f32.gmra.mxu0 %v475
    %v519 = vpop.f32.mrf.mxu0
    %v520 = vadd.f32 0.0, %v519
    %521 = vmatmul.f32.gmra.mxu0 %v478
    %v522 = vpop.f32.mrf.mxu0
    %v523 = vadd.f32 0.0, %v522
    %524 = vmatmul.f32.gmra.mxu0 %v481
    %v525 = vpop.f32.mrf.mxu0
    %v526 = vadd.f32 0.0, %v525
    %527 = vmatmul.f32.gmra.mxu0 %v484
    %v528 = vpop.f32.mrf.mxu0
    %v529 = vadd.f32 0.0, %v528
    %530 = vmatmul.f32.gmra.mxu0 %v487
    %v531 = vpop.f32.mrf.mxu0
    %v532 = vadd.f32 0.0, %v531
    %533 = vmatmul.f32.gmra.mxu0 %v490
    %v534 = vpop.f32.mrf.mxu0
    %v535 = vadd.f32 0.0, %v534
    %536 = vmatmul.f32.gmra.mxu0 %v493
    %v537 = vpop.f32.mrf.mxu0
    %v538 = vadd.f32 0.0, %v537
    %539 = vdwg.mxu0
    %540 = vrot.lane.b32.xlu0 %v208, 64
    %v541 = vpop.permute.xlu0 %540
    %v543 = vmul.f32 %v517, %v541
    %v544 = vmul.f32 %v520, %v541
    %v545 = vmul.f32 %v523, %v541
    %v546 = vmul.f32 %v526, %v541
    %v547 = vmul.f32 %v529, %v541
    %v548 = vmul.f32 %v532, %v541
    %v549 = vmul.f32 %v535, %v541
    %v550 = vmul.f32 %v538, %v541
    %v551 = vsel %vm183, %v543, 0.0
    %v552 = vrot.slane %v551, 4
    %v553 = vadd.f32 %v551, %v552
    %v554 = vrot.slane %v553, 2
    %v555 = vadd.f32 %v553, %v554
    %v556 = vrot.slane %v555, 1
    %v557 = vadd.f32 %v555, %v556
    %v558 = vsel %vm183, %v544, 0.0
    %v559 = vrot.slane %v558, 4
    %v560 = vadd.f32 %v558, %v559
    %v561 = vrot.slane %v560, 2
    %v562 = vadd.f32 %v560, %v561
    %v563 = vrot.slane %v562, 1
    %v564 = vadd.f32 %v562, %v563
    %v565 = vsel %vm183, %v545, 0.0
    %v566 = vrot.slane %v565, 4
    %v567 = vadd.f32 %v565, %v566
    %v568 = vrot.slane %v567, 2
    %v569 = vadd.f32 %v567, %v568
    %v570 = vrot.slane %v569, 1
    %v571 = vadd.f32 %v569, %v570
    %v572 = vsel %vm183, %v546, 0.0
    %v573 = vrot.slane %v572, 4
    %v574 = vadd.f32 %v572, %v573
    %v575 = vrot.slane %v574, 2
    %v576 = vadd.f32 %v574, %v575
    %v577 = vrot.slane %v576, 1
    %v578 = vadd.f32 %v576, %v577
    %v579 = vsel %vm183, %v547, 0.0
    %v580 = vrot.slane %v579, 4
    %v581 = vadd.f32 %v579, %v580
    %v582 = vrot.slane %v581, 2
    %v583 = vadd.f32 %v581, %v582
    %v584 = vrot.slane %v583, 1
    %v585 = vadd.f32 %v583, %v584
    %v586 = vsel %vm183, %v548, 0.0
    %v587 = vrot.slane %v586, 4
    %v588 = vadd.f32 %v586, %v587
    %v589 = vrot.slane %v588, 2
    %v590 = vadd.f32 %v588, %v589
    %v591 = vrot.slane %v590, 1
    %v592 = vadd.f32 %v590, %v591
    %v593 = vsel %vm183, %v549, 0.0
    %v594 = vrot.slane %v593, 4
    %v595 = vadd.f32 %v593, %v594
    %v596 = vrot.slane %v595, 2
    %v597 = vadd.f32 %v595, %v596
    %v598 = vrot.slane %v597, 1
    %v599 = vadd.f32 %v597, %v598
    %v600 = vsel %vm183, %v550, 0.0
    %v601 = vrot.slane %v600, 4
    %v602 = vadd.f32 %v600, %v601
    %v603 = vrot.slane %v602, 2
    %v604 = vadd.f32 %v602, %v603
    %v605 = vrot.slane %v604, 1
    %v606 = vadd.f32 %v604, %v605
    %v608 = vrot.slane %v211, 1
    %v609 = vrot.slane %v211, 2
    %v610 = vrot.slane %v211, 3
    %v611 = vrot.slane %v211, 4
    %v612 = vrot.slane %v211, 5
    %v613 = vrot.slane %v211, 6
    %v614 = vrot.slane %v211, 7
    %v615 = vperm.slane %v211, 0
    %v616 = vperm.slane %v608, 0
    %v617 = vperm.slane %v609, 0
    %v618 = vperm.slane %v610, 0
    %v619 = vperm.slane %v611, 0
    %v620 = vperm.slane %v612, 0
    %v621 = vperm.slane %v613, 0
    %v622 = vperm.slane %v614, 0
    %631 = vrot.lane.b32.xlu0 %v211, 96
    %v632 = vpop.permute.xlu0 %631
    %v634 = vmul.f32 %v615, %v632
    %v635 = vmul.f32 %v616, %v632
    %v636 = vmul.f32 %v617, %v632
    %v637 = vmul.f32 %v618, %v632
    %v638 = vmul.f32 %v619, %v632
    %v639 = vmul.f32 %v620, %v632
    %v640 = vmul.f32 %v621, %v632
    %v641 = vmul.f32 %v622, %v632
    %v643 = vsel %vm183, %v634, 0
    %v646 = vsel %vm183, %v635, 0
    %v649 = vsel %vm183, %v636, 0
    %v652 = vsel %vm183, %v637, 0
    %v655 = vsel %vm183, %v638, 0
    %v658 = vsel %vm183, %v639, 0
    %v661 = vsel %vm183, %v640, 0
    %v664 = vsel %vm183, %v641, 0
    %666 = vmatpush.msra.mxu0 0.0
    %667 = vmatpush.msra.mxu0 0.0
    %668 = vmatpush.msra.mxu0 0.0
    %669 = vmatpush.msra.mxu0 0.0
    %670 = vmatpush.msra.mxu0 0.0
    %671 = vmatpush.msra.mxu0 0.0
    %672 = vmatpush.msra.mxu0 0.0
    %673 = vmatpush.msra.mxu0 0.0
    %674 = vmatpush.msra.mxu0 0.0
    %675 = vmatpush.msra.mxu0 0.0
    %676 = vmatpush.msra.mxu0 0.0
    %677 = vmatpush.msra.mxu0 0.0
    %678 = vmatpush.msra.mxu0 %v216
    %679 = vmatpush.msra.mxu0 %v215
    %680 = vmatpush.msra.mxu0 %v214
    %681 = vmatpush.msra.mxu0 %v213
    %682 = vmatmul.f32.gmra.mxu0 %v643
    %v683 = vpop.f32.mrf.mxu0
    %v684 = vadd.f32 0.0, %v683
    %685 = vmatmul.f32.gmra.mxu0 %v646
    %v686 = vpop.f32.mrf.mxu0
    %v687 = vadd.f32 0.0, %v686
    %688 = vmatmul.f32.gmra.mxu0 %v649
    %v689 = vpop.f32.mrf.mxu0
    %v690 = vadd.f32 0.0, %v689
    %691 = vmatmul.f32.gmra.mxu0 %v652
    %v692 = vpop.f32.mrf.mxu0
    %v693 = vadd.f32 0.0, %v692
    %694 = vmatmul.f32.gmra.mxu0 %v655
    %v695 = vpop.f32.mrf.mxu0
    %v696 = vadd.f32 0.0, %v695
    %697 = vmatmul.f32.gmra.mxu0 %v658
    %v698 = vpop.f32.mrf.mxu0
    %v699 = vadd.f32 0.0, %v698
    %700 = vmatmul.f32.gmra.mxu0 %v661
    %v701 = vpop.f32.mrf.mxu0
    %v702 = vadd.f32 0.0, %v701
    %703 = vmatmul.f32.gmra.mxu0 %v664
    %v704 = vpop.f32.mrf.mxu0
    %v705 = vadd.f32 0.0, %v704
    %706 = vdwg.mxu0
    %v707 = vsel %vm318, %v684, -inf
    %v708 = vrot.slane %v707, 4
    %v709 = vmax.f32 %v707, %v708
    %v710 = vrot.slane %v709, 2
    %v711 = vmax.f32 %v709, %v710
    %v712 = vrot.slane %v711, 1
    %v713 = vmax.f32 %v711, %v712
    %v714 = vsel %vm318, %v687, -inf
    %v715 = vrot.slane %v714, 4
    %v716 = vmax.f32 %v714, %v715
    %v717 = vrot.slane %v716, 2
    %v718 = vmax.f32 %v716, %v717
    %v719 = vrot.slane %v718, 1
    %v720 = vmax.f32 %v718, %v719
    %v721 = vsel %vm318, %v690, -inf
    %v722 = vrot.slane %v721, 4
    %v723 = vmax.f32 %v721, %v722
    %v724 = vrot.slane %v723, 2
    %v725 = vmax.f32 %v723, %v724
    %v726 = vrot.slane %v725, 1
    %v727 = vmax.f32 %v725, %v726
    %v728 = vsel %vm318, %v693, -inf
    %v729 = vrot.slane %v728, 4
    %v730 = vmax.f32 %v728, %v729
    %v731 = vrot.slane %v730, 2
    %v732 = vmax.f32 %v730, %v731
    %v733 = vrot.slane %v732, 1
    %v734 = vmax.f32 %v732, %v733
    %v735 = vsel %vm318, %v696, -inf
    %v736 = vrot.slane %v735, 4
    %v737 = vmax.f32 %v735, %v736
    %v738 = vrot.slane %v737, 2
    %v739 = vmax.f32 %v737, %v738
    %v740 = vrot.slane %v739, 1
    %v741 = vmax.f32 %v739, %v740
    %v742 = vsel %vm318, %v699, -inf
    %v743 = vrot.slane %v742, 4
    %v744 = vmax.f32 %v742, %v743
    %v745 = vrot.slane %v744, 2
    %v746 = vmax.f32 %v744, %v745
    %v747 = vrot.slane %v746, 1
    %v748 = vmax.f32 %v746, %v747
    %v749 = vsel %vm318, %v702, -inf
    %v750 = vrot.slane %v749, 4
    %v751 = vmax.f32 %v749, %v750
    %v752 = vrot.slane %v751, 2
    %v753 = vmax.f32 %v751, %v752
    %v754 = vrot.slane %v753, 1
    %v755 = vmax.f32 %v753, %v754
    %v756 = vsel %vm318, %v705, -inf
    %v757 = vrot.slane %v756, 4
    %v758 = vmax.f32 %v756, %v757
    %v759 = vrot.slane %v758, 2
    %v760 = vmax.f32 %v758, %v759
    %v761 = vrot.slane %v760, 1
    %v762 = vmax.f32 %v760, %v761
    %v763 = vsub.f32 %v684, %v713
    %v764 = vsub.f32 %v687, %v720
    %v765 = vsub.f32 %v690, %v727
    %v766 = vsub.f32 %v693, %v734
    %v767 = vsub.f32 %v696, %v741
    %v768 = vsub.f32 %v699, %v748
    %v769 = vsub.f32 %v702, %v755
    %v770 = vsub.f32 %v705, %v762
    %v771 = vmul.f32 %v763, 1.442695
    %v772 = vpow.pop %v771
    %v773 = vmul.f32 %v764, 1.442695
    %v774 = vpow.pop %v773
    %v775 = vmul.f32 %v765, 1.442695
    %v776 = vpow.pop %v775
    %v777 = vmul.f32 %v766, 1.442695
    %v778 = vpow.pop %v777
    %v779 = vmul.f32 %v767, 1.442695
    %v780 = vpow.pop %v779
    %v781 = vmul.f32 %v768, 1.442695
    %v782 = vpow.pop %v781
    %v783 = vmul.f32 %v769, 1.442695
    %v784 = vpow.pop %v783
    %v785 = vmul.f32 %v770, 1.442695
    %v786 = vpow.pop %v785
    %v787 = vsel %vm318, %v772, 0.0
    %v788 = vrot.slane %v787, 4
    %v789 = vadd.f32 %v787, %v788
    %v790 = vrot.slane %v789, 2
    %v791 = vadd.f32 %v789, %v790
    %v792 = vrot.slane %v791, 1
    %v793 = vadd.f32 %v791, %v792
    %v794 = vsel %vm318, %v774, 0.0
    %v795 = vrot.slane %v794, 4
    %v796 = vadd.f32 %v794, %v795
    %v797 = vrot.slane %v796, 2
    %v798 = vadd.f32 %v796, %v797
    %v799 = vrot.slane %v798, 1
    %v800 = vadd.f32 %v798, %v799
    %v801 = vsel %vm318, %v776, 0.0
    %v802 = vrot.slane %v801, 4
    %v803 = vadd.f32 %v801, %v802
    %v804 = vrot.slane %v803, 2
    %v805 = vadd.f32 %v803, %v804
    %v806 = vrot.slane %v805, 1
    %v807 = vadd.f32 %v805, %v806
    %v808 = vsel %vm318, %v778, 0.0
    %v809 = vrot.slane %v808, 4
    %v810 = vadd.f32 %v808, %v809
    %v811 = vrot.slane %v810, 2
    %v812 = vadd.f32 %v810, %v811
    %v813 = vrot.slane %v812, 1
    %v814 = vadd.f32 %v812, %v813
    %v815 = vsel %vm318, %v780, 0.0
    %v816 = vrot.slane %v815, 4
    %v817 = vadd.f32 %v815, %v816
    %v818 = vrot.slane %v817, 2
    %v819 = vadd.f32 %v817, %v818
    %v820 = vrot.slane %v819, 1
    %v821 = vadd.f32 %v819, %v820
    %v822 = vsel %vm318, %v782, 0.0
    %v823 = vrot.slane %v822, 4
    %v824 = vadd.f32 %v822, %v823
    %v825 = vrot.slane %v824, 2
    %v826 = vadd.f32 %v824, %v825
    %v827 = vrot.slane %v826, 1
    %v828 = vadd.f32 %v826, %v827
    %v829 = vsel %vm318, %v784, 0.0
    %v830 = vrot.slane %v829, 4
    %v831 = vadd.f32 %v829, %v830
    %v832 = vrot.slane %v831, 2
    %v833 = vadd.f32 %v831, %v832
    %v834 = vrot.slane %v833, 1
    %v835 = vadd.f32 %v833, %v834
    %v836 = vsel %vm318, %v786, 0.0
    %v837 = vrot.slane %v836, 4
    %v838 = vadd.f32 %v836, %v837
    %v839 = vrot.slane %v838, 2
    %v840 = vadd.f32 %v838, %v839
    %v841 = vrot.slane %v840, 1
    %v842 = vadd.f32 %v840, %v841
    %v843 = vrcp.pop %v793
    %v844 = vrcp.pop %v800
    %v845 = vrcp.pop %v807
    %v846 = vrcp.pop %v814
    %v847 = vrcp.pop %v821
    %v848 = vrcp.pop %v828
    %v849 = vrcp.pop %v835
    %v850 = vrcp.pop %v842
    %v851 = vmul.f32 %v772, %v843
    %v852 = vmul.f32 %v774, %v844
    %v853 = vmul.f32 %v776, %v845
    %v854 = vmul.f32 %v778, %v846
    %v855 = vmul.f32 %v780, %v847
    %v856 = vmul.f32 %v782, %v848
    %v857 = vmul.f32 %v784, %v849
    %v858 = vmul.f32 %v786, %v850
    %v860 = vsel %vm318, %v851, 0
    %v863 = vsel %vm318, %v852, 0
    %v866 = vsel %vm318, %v853, 0
    %v869 = vsel %vm318, %v854, 0
    %v872 = vsel %vm318, %v855, 0
    %v875 = vsel %vm318, %v856, 0
    %v878 = vsel %vm318, %v857, 0
    %v881 = vsel %vm318, %v858, 0
    %883 = vmatpush.msra.mxu0 0.0
    %884 = vmatpush.msra.mxu0 0.0
    %885 = vmatpush.msra.mxu0 0.0
    %886 = vmatpush.msra.mxu0 0.0
    %887 = vmatpush.msra.mxu0 0.0
    %888 = vmatpush.msra.mxu0 0.0
    %889 = vmatpush.msra.mxu0 0.0
    %890 = vmatpush.msra.mxu0 0.0
    %891 = vmatpush.msra.mxu0 0.0
    %892 = vmatpush.msra.mxu0 0.0
    %893 = vmatpush.msra.mxu0 0.0
    %894 = vmatpush.msra.mxu0 0.0
    %895 = vmatpush.msra.mxu0 0.0
    %896 = vmatpush.msra.mxu0 0.0
    %897 = vmatpush.msra.mxu0 0.0
    %898 = vmatpush.msra.mxu0 %v497
    %899 = vmatmul.f32.gmra.mxu0 %v860
    %v900 = vpop.f32.mrf.mxu0
    %v901 = vadd.f32 0.0, %v900
    %902 = vmatmul.f32.gmra.mxu0 %v863
    %v903 = vpop.f32.mrf.mxu0
    %v904 = vadd.f32 0.0, %v903
    %905 = vmatmul.f32.gmra.mxu0 %v866
    %v906 = vpop.f32.mrf.mxu0
    %v907 = vadd.f32 0.0, %v906
    %908 = vmatmul.f32.gmra.mxu0 %v869
    %v909 = vpop.f32.mrf.mxu0
    %v910 = vadd.f32 0.0, %v909
    %911 = vmatmul.f32.gmra.mxu0 %v872
    %v912 = vpop.f32.mrf.mxu0
    %v913 = vadd.f32 0.0, %v912
    %914 = vmatmul.f32.gmra.mxu0 %v875
    %v915 = vpop.f32.mrf.mxu0
    %v916 = vadd.f32 0.0, %v915
    %917 = vmatmul.f32.gmra.mxu0 %v878
    %v918 = vpop.f32.mrf.mxu0
    %v919 = vadd.f32 0.0, %v918
    %920 = vmatmul.f32.gmra.mxu0 %v881
    %v921 = vpop.f32.mrf.mxu0
    %v922 = vadd.f32 0.0, %v921
    %923 = vdwg.mxu0
    %924 = vrot.lane.b32.xlu0 %v211, 64
    %v925 = vpop.permute.xlu0 %924
    %v927 = vmul.f32 %v901, %v925
    %v928 = vmul.f32 %v904, %v925
    %v929 = vmul.f32 %v907, %v925
    %v930 = vmul.f32 %v910, %v925
    %v931 = vmul.f32 %v913, %v925
    %v932 = vmul.f32 %v916, %v925
    %v933 = vmul.f32 %v919, %v925
    %v934 = vmul.f32 %v922, %v925
    %v935 = vsel %vm183, %v927, 0.0
    %v936 = vrot.slane %v935, 4
    %v937 = vadd.f32 %v935, %v936
    %v938 = vrot.slane %v937, 2
    %v939 = vadd.f32 %v937, %v938
    %v940 = vrot.slane %v939, 1
    %v941 = vadd.f32 %v939, %v940
    %v942 = vsel %vm183, %v928, 0.0
    %v943 = vrot.slane %v942, 4
    %v944 = vadd.f32 %v942, %v943
    %v945 = vrot.slane %v944, 2
    %v946 = vadd.f32 %v944, %v945
    %v947 = vrot.slane %v946, 1
    %v948 = vadd.f32 %v946, %v947
    %v949 = vsel %vm183, %v929, 0.0
    %v950 = vrot.slane %v949, 4
    %v951 = vadd.f32 %v949, %v950
    %v952 = vrot.slane %v951, 2
    %v953 = vadd.f32 %v951, %v952
    %v954 = vrot.slane %v953, 1
    %v955 = vadd.f32 %v953, %v954
    %v956 = vsel %vm183, %v930, 0.0
    %v957 = vrot.slane %v956, 4
    %v958 = vadd.f32 %v956, %v957
    %v959 = vrot.slane %v958, 2
    %v960 = vadd.f32 %v958, %v959
    %v961 = vrot.slane %v960, 1
    %v962 = vadd.f32 %v960, %v961
    %v963 = vsel %vm183, %v931, 0.0
    %v964 = vrot.slane %v963, 4
    %v965 = vadd.f32 %v963, %v964
    %v966 = vrot.slane %v965, 2
    %v967 = vadd.f32 %v965, %v966
    %v968 = vrot.slane %v967, 1
    %v969 = vadd.f32 %v967, %v968
    %v970 = vsel %vm183, %v932, 0.0
    %v971 = vrot.slane %v970, 4
    %v972 = vadd.f32 %v970, %v971
    %v973 = vrot.slane %v972, 2
    %v974 = vadd.f32 %v972, %v973
    %v975 = vrot.slane %v974, 1
    %v976 = vadd.f32 %v974, %v975
    %v977 = vsel %vm183, %v933, 0.0
    %v978 = vrot.slane %v977, 4
    %v979 = vadd.f32 %v977, %v978
    %v980 = vrot.slane %v979, 2
    %v981 = vadd.f32 %v979, %v980
    %v982 = vrot.slane %v981, 1
    %v983 = vadd.f32 %v981, %v982
    %v984 = vsel %vm183, %v934, 0.0
    %v985 = vrot.slane %v984, 4
    %v986 = vadd.f32 %v984, %v985
    %v987 = vrot.slane %v986, 2
    %v988 = vadd.f32 %v986, %v987
    %v989 = vrot.slane %v988, 1
    %v990 = vadd.f32 %v988, %v989
    %vm999 = vcmask 1041409
    %v1000 = vsel %vm999, %v564, %v557
    %vm1001 = vcmask 1042434
    %v1002 = vsel %vm1001, %v571, %v1000
    %vm1003 = vcmask 1043459
    %v1004 = vsel %vm1003, %v578, %v1002
    %vm1005 = vcmask 1044484
    %v1006 = vsel %vm1005, %v585, %v1004
    %vm1007 = vcmask 1045509
    %v1008 = vsel %vm1007, %v592, %v1006
    %vm1009 = vcmask 1046534
    %v1010 = vsel %vm1009, %v599, %v1008
    %vm1011 = vcmask 1047559
    %v1012 = vsel %vm1011, %v606, %v1010
    %v1021 = vsel %vm999, %v948, %v941
    %v1022 = vsel %vm1001, %v955, %v1021
    %v1023 = vsel %vm1003, %v962, %v1022
    %v1024 = vsel %vm1005, %v969, %v1023
    %v1025 = vsel %vm1007, %v976, %v1024
    %v1026 = vsel %vm1009, %v983, %v1025
    %v1027 = vsel %vm1011, %v990, %v1026
    %v1028 = vld [vmem:[%s5] sm:$0xff]
    %v1029 = vld [vmem:[%s5 + $0x8] sm:$0xff]
    %v1030 = vld [vmem:[%s5 + $0x10] sm:$0xff]
    %v1031 = vld [vmem:[%s5 + $0x18] sm:$0xff]
    %v1032 = vld [vmem:[#allocation7] sm:$0x1]
    %v1034 = vperm.slane %v1032, 0
    %v1036 = vsel %vm183, %v1012, 0
    %v1038 = vsel %vm183, %v1027, 0
    %1040 = vmatpush.msra.mxu0 0.0
    %1041 = vmatpush.msra.mxu0 0.0
    %1042 = vmatpush.msra.mxu0 0.0
    %1043 = vmatpush.msra.mxu0 0.0
    %1044 = vmatpush.msra.mxu0 0.0
    %1045 = vmatpush.msra.mxu0 0.0
    %1046 = vmatpush.msra.mxu0 0.0
    %1047 = vmatpush.msra.mxu0 0.0
    %1048 = vmatpush.msra.mxu0 0.0
    %1049 = vmatpush.msra.mxu0 0.0
    %1050 = vmatpush.msra.mxu0 0.0
    %1051 = vmatpush.msra.mxu0 0.0
    %1052 = vmatpush.msra.mxu0 %v1031
    %1053 = vmatpush.msra.mxu0 %v1030
    %1054 = vmatpush.msra.mxu0 %v1029
    %1055 = vmatpush.msra.mxu0 %v1028
    %1056 = vmatmul.f32.gmra.mxu0 %v1036
    %v1057 = vpop.f32.mrf.mxu0
    %v1058 = vadd.f32 %v1034, %v1057
    %1059 = vmatmul.f32.gmra.mxu0 %v1038
    %v1060 = vpop.f32.mrf.mxu0
    %v1061 = vadd.f32 %v1034, %v1060
    %1062 = vdwg.mxu0
    %v1063 = vadd.f32 %v1058, %v173
    %v1064 = vadd.f32 %v1061, %v174
    %v1065 = vld [vmem:[#allocation8] sm:$0x1]
    %v1066 = vld [vmem:[#allocation10] sm:$0x1]
    %v1067 = vsel %vm183, %v1063, 0.0
    %1068 = vadd.xlane.f32.xlu0 %v1067
    %v1069 = vpop.xlane.xlu0 %1068
    %v1070 = vsel %vm183, %v1064, 0.0
    %1071 = vadd.xlane.f32.xlu0 %v1070
    %v1072 = vpop.xlane.xlu0 %1071
    %v1073 = vrcp.pop 32.0
    %v1074 = vmul.f32 32.0, %v1073
    %v1075 = vsub.f32 1.0, %v1074
    %v1076 = vmul.f32 %v1073, %v1075
    %v1077 = vadd.f32 %v1073, %v1076
    %vm1078 = vweird.f32 %v1073
    %v1079 = vsel %vm1078, %v1073, %v1077
    %v1080 = vmul.f32 %v1069, %v1079
    %v1081 = vmul.f32 %v1072, %v1079
    %v1082 = vsub.f32 %v1063, %v1080
    %v1083 = vsub.f32 %v1064, %v1081
    %v1084 = vmul.f32 %v1082, %v1082
    %v1085 = vmul.f32 %v1083, %v1083
    %v1086 = vsel %vm183, %v1084, 0.0
    %1087 = vadd.xlane.f32.xlu0 %v1086
    %v1088 = vpop.xlane.xlu0 %1087
    %v1089 = vsel %vm183, %v1085, 0.0
    %1090 = vadd.xlane.f32.xlu0 %v1089
    %v1091 = vpop.xlane.xlu0 %1090
    %v1092 = vmul.f32 %v1088, %v1079
    %v1093 = vmul.f32 %v1091, %v1079
    %v1094 = vadd.f32 %v1092, 1e-05
    %v1095 = vadd.f32 %v1093, 1e-05
    %v1096 = vrsqrt.pop %v1094
    %v1097 = vmul.f32 %v1096, %v1094
    %v1098 = vmul.f32 %v1097, %v1096
    %v1099 = vmul.f32 0.5, %v1098
    %v1100 = vsub.f32 1.5, %v1099
    %v1101 = vmul.f32 %v1096, %v1100
    %vm1102 = vweird.f32 %v1094
    %vm1103 = vweird.f32 %v1096
    %vm1104 = vmor %vm1102, %vm1103
    %v1105 = vsel %vm1104, %v1096, %v1101
    %v1106 = vrsqrt.pop %v1095
    %v1107 = vmul.f32 %v1106, %v1095
    %v1108 = vmul.f32 %v1107, %v1106
    %v1109 = vmul.f32 0.5, %v1108
    %v1110 = vsub.f32 1.5, %v1109
    %v1111 = vmul.f32 %v1106, %v1110
    %vm1112 = vweird.f32 %v1095
    %vm1113 = vweird.f32 %v1106
    %vm1114 = vmor %vm1112, %vm1113
    %v1115 = vsel %vm1114, %v1106, %v1111
    %v1116 = vmul.f32 %v1082, %v1105
    %v1117 = vmul.f32 %v1083, %v1115
    %v1119 = vperm.slane %v1065, 0
    %v1121 = vmul.f32 %v1116, %v1119
    %v1122 = vmul.f32 %v1117, %v1119
    %v1124 = vperm.slane %v1066, 0
    %v1126 = vadd.f32 %v1121, %v1124
    %v1127 = vadd.f32 %v1122, %v1124
    %v1128 = vld [vmem:[%s9] sm:$0xff]
    %v1129 = vld [vmem:[%s9 + $0x8] sm:$0xff]
    %v1130 = vld [vmem:[%s9 + $0x10] sm:$0xff]
    %v1131 = vld [vmem:[%s9 + $0x18] sm:$0xff]
    %v1132 = vld [vmem:[#allocation11] sm:$0x1]
    %v1134 = vperm.slane %v1132, 0
    %v1137 = vsel %vm183, %v1126, 0
    %v1140 = vsel %vm183, %v1127, 0
    %1142 = vmatpush.msra.mxu0 0.0
    %1143 = vmatpush.msra.mxu0 0.0
    %1144 = vmatpush.msra.mxu0 0.0
    %1145 = vmatpush.msra.mxu0 0.0
    %1146 = vmatpush.msra.mxu0 0.0
    %1147 = vmatpush.msra.mxu0 0.0
    %1148 = vmatpush.msra.mxu0 0.0
    %1149 = vmatpush.msra.mxu0 0.0
    %1150 = vmatpush.msra.mxu0 0.0
    %1151 = vmatpush.msra.mxu0 0.0
    %1152 = vmatpush.msra.mxu0 0.0
    %1153 = vmatpush.msra.mxu0 0.0
    %1154 = vmatpush.msra.mxu0 %v1131
    %1155 = vmatpush.msra.mxu0 %v1130
    %1156 = vmatpush.msra.mxu0 %v1129
    %1157 = vmatpush.msra.mxu0 %v1128
    %1158 = vmatmul.f32.gmra.mxu0 %v1137
    %v1159 = vpop.f32.mrf.mxu0
    %v1160 = vadd.f32 %v1134, %v1159
    %1161 = vmatmul.f32.gmra.mxu0 %v1140
    %v1162 = vpop.f32.mrf.mxu0
    %v1163 = vadd.f32 %v1134, %v1162
    %1164 = vdwg.mxu0
    %v1165 = vmax.f32 %v1160, 0.0
    %v1166 = vmax.f32 %v1163, 0.0
    %v1167 = vld [vmem:[%s11] sm:$0xff]
    %v1168 = vld [vmem:[%s11 + $0x8] sm:$0xff]
    %v1169 = vld [vmem:[%s11 + $0x10] sm:$0xff]
    %v1170 = vld [vmem:[%s11 + $0x18] sm:$0xff]
    %v1171 = vld [vmem:[%s11 + $0x20] sm:$0xff]
    %v1172 = vld [vmem:[%s11 + $0x28] sm:$0xff]
    %v1173 = vld [vmem:[%s11 + $0x30] sm:$0xff]
    %v1174 = vld [vmem:[%s11 + $0x38] sm:$0xff]
    %v1175 = vld [vmem:[#allocation13] sm:$0x1]
    %v1177 = vperm.slane %v1175, 0
    %vm1179 = vcmask 523264
    %v1181 = vsel %vm1179, %v1165, 0
    %v1184 = vsel %vm1179, %v1166, 0
    %1186 = vmatpush.msra.mxu0 0.0
    %1187 = vmatpush.msra.mxu0 0.0
    %1188 = vmatpush.msra.mxu0 0.0
    %1189 = vmatpush.msra.mxu0 0.0
    %1190 = vmatpush.msra.mxu0 0.0
    %1191 = vmatpush.msra.mxu0 0.0
    %1192 = vmatpush.msra.mxu0 0.0
    %1193 = vmatpush.msra.mxu0 0.0
    %1194 = vmatpush.msra.mxu0 %v1174
    %1195 = vmatpush.msra.mxu0 %v1173
    %1196 = vmatpush.msra.mxu0 %v1172
    %1197 = vmatpush.msra.mxu0 %v1171
    %1198 = vmatpush.msra.mxu0 %v1170
    %1199 = vmatpush.msra.mxu0 %v1169
    %1200 = vmatpush.msra.mxu0 %v1168
    %1201 = vmatpush.msra.mxu0 %v1167
    %1202 = vmatmul.f32.gmra.mxu0 %v1181
    %v1203 = vpop.f32.mrf.mxu0
    %v1204 = vadd.f32 %v1177, %v1203
    %1205 = vmatmul.f32.gmra.mxu0 %v1184
    %v1206 = vpop.f32.mrf.mxu0
    %v1207 = vadd.f32 %v1177, %v1206
    %1208 = vdwg.mxu0
    %v1209 = vadd.f32 %v1204, %v1126
    %v1210 = vadd.f32 %v1207, %v1127
    %v1211 = vld [vmem:[#allocation14] sm:$0x1]
    %v1212 = vld [vmem:[#allocation16] sm:$0x1]
    %v1213 = vsel %vm183, %v1209, 0.0
    %1214 = vadd.xlane.f32.xlu0 %v1213
    %v1215 = vpop.xlane.xlu0 %1214
    %v1216 = vsel %vm183, %v1210, 0.0
    %1217 = vadd.xlane.f32.xlu0 %v1216
    %v1218 = vpop.xlane.xlu0 %1217
    %v1219 = vmul.f32 %v1215, %v1079
    %v1220 = vmul.f32 %v1218, %v1079
    %v1221 = vsub.f32 %v1209, %v1219
    %v1222 = vsub.f32 %v1210, %v1220
    %v1223 = vmul.f32 %v1221, %v1221
    %v1224 = vmul.f32 %v1222, %v1222
    %v1225 = vsel %vm183, %v1223, 0.0
    %1226 = vadd.xlane.f32.xlu0 %v1225
    %v1227 = vpop.xlane.xlu0 %1226
    %v1228 = vsel %vm183, %v1224, 0.0
    %1229 = vadd.xlane.f32.xlu0 %v1228
    %v1230 = vpop.xlane.xlu0 %1229
    %v1231 = vmul.f32 %v1227, %v1079
    %v1232 = vmul.f32 %v1230, %v1079
    %v1233 = vadd.f32 %v1231, 1e-05
    %v1234 = vadd.f32 %v1232, 1e-05
    %v1235 = vrsqrt.pop %v1233
    %v1236 = vmul.f32 %v1235, %v1233
    %v1237 = vmul.f32 %v1236, %v1235
    %v1238 = vmul.f32 0.5, %v1237
    %v1239 = vsub.f32 1.5, %v1238
    %v1240 = vmul.f32 %v1235, %v1239
    %vm1241 = vweird.f32 %v1233
    %vm1242 = vweird.f32 %v1235
    %vm1243 = vmor %vm1241, %vm1242
    %v1244 = vsel %vm1243, %v1235, %v1240
    %v1245 = vrsqrt.pop %v1234
    %v1246 = vmul.f32 %v1245, %v1234
    %v1247 = vmul.f32 %v1246, %v1245
    %v1248 = vmul.f32 0.5, %v1247
    %v1249 = vsub.f32 1.5, %v1248
    %v1250 = vmul.f32 %v1245, %v1249
    %vm1251 = vweird.f32 %v1234
    %vm1252 = vweird.f32 %v1245
    %vm1253 = vmor %vm1251, %vm1252
    %v1254 = vsel %vm1253, %v1245, %v1250
    %v1255 = vmul.f32 %v1221, %v1244
    %v1256 = vmul.f32 %v1222, %v1254
    %v1258 = vperm.slane %v1211, 0
    %v1260 = vmul.f32 %v1255, %v1258
    %v1261 = vmul.f32 %v1256, %v1258
    %v1263 = vperm.slane %v1212, 0
    %v1265 = vadd.f32 %v1260, %v1263
    %v1266 = vadd.f32 %v1261, %v1263
    %1267 = vst.msk [vmem:[#allocation17] sm:$0xff] %vm183, %v1265
    %1268 = vst.msk [vmem:[#allocation17 + $0x8] sm:$0xff] %vm183, %v1266
    // Predicated region
    $region98: #{encoder_layer.1} parent=1 // pred_check
      _
    $region99: #{encoder_layer.1} parent=1 // pred_check_branch
      %1270 = sbr.rel (0) target = $region101
    $region100: #{encoder_layer.1} parent=1 // pred_region
      %1272 = vsyncadd [#allocation4], 0
      %s1273 = sshll.u32 [#allocation17], 4
      %s1274 = int_to_ptr.vmem [resolvable:$true] %s1273
      %s1275 = sshll.u32 %s15, 4
      %s1276 = int_to_ptr.hbm [resolvable:$true] %s1275
      %1281 = dma.vmem_to_hbm [thread:$0]  %s1274, 256, %s1276, [#allocation4], 128, 128, 8
    $region101: #{encoder_layer.1} parent=1 // pred_fallthru
      _
    // Predicated region
    $region102: #{encoder_layer.1} parent=1 // pred_check
      _
    $region103: #{encoder_layer.1} parent=1 // pred_check_branch
      %1283 = sbr.rel (0) target = $region105
    $region104: #{encoder_layer.1} parent=1 // pred_region
      %1285 = dma.done [#allocation4], 256
    $region105: #{encoder_layer.1} parent=1 // pred_fallthru
      _
    %1286 = vsyncpa [#allocation3], 1
    %1287 = vsyncpa [#allocation6], 1
    %1288 = vsyncpa [#allocation9], 1
    %1289 = vsyncpa [#allocation12], 1
    %1290 = vsyncpa [#allocation15], 1
    %1291 = vsyncpa [#allocation4], 1

</llo_original>
